<compile_context>
chip_gen: v7x
topology: tpu7x:2x2x1
jax: 0.10.0
libtpu: 0.0.40
codegen_flags: <defaults>
</compile_context>

<pallas_src>
import math

import jax
import jax.numpy as jnp
from jax.experimental import pallas as pl
from jax.experimental.pallas import tpu as pltpu

LANE = 128


def _round_up(n: int, m: int) -> int:
    return ((n + m - 1) // m) * m


# ----------------------------- fused Pallas kernel ----------------------------- #

def _funnel_kernel(*refs):
    """refs = (x_ref, w0, s0, w1, s1, ..., wL, sL, o_ref).

    Each layer: y = h @ W' + shift'  (eval-mode BN folded into W'/shift'); hidden layers
    apply ReLU (Dropout == identity in eval), the last layer writes the raw affine output.
    The batch tile is split into two independent row-halves (when 16-row aligned) so the
    scheduler can overlap one half's f32 epilogue with the other half's MXU matmul instead
    of draining between data-dependent layers.
    """
    x_ref = refs[0]
    o_ref = refs[-1]
    params = refs[1:-1]
    n_layers = len(params) // 2
    act_dt = params[0].dtype                      # bf16 (default) or f32

    tm = x_ref.shape[0]
    split = (tm >= 16) and (tm % 16 == 0)         # halves must stay sublane(8)-aligned
    if split:
        half = tm // 2
        halves = [x_ref[:half, :], x_ref[half:, :]]
        row0 = [0, half]
    else:
        halves = [x_ref[...]]
        row0 = [0]

    for li in range(n_layers):
        w = params[2 * li][...]                   # (din_pad, dout_pad), act_dt
        s = params[2 * li + 1][...]               # (1, dout_pad), f32 (epilogue stays f32)
        last = li == n_layers - 1
        # Two independent chains -> interleaved MXU pushes / VPU epilogues.
        ys = [jnp.dot(h.astype(act_dt), w, preferred_element_type=jnp.float32) + s
              for h in halves]
        if last:
            for r0, y in zip(row0, ys):
                o_ref[r0:r0 + y.shape[0], :] = y.astype(o_ref.dtype)
        else:
            halves = [jnp.maximum(y, 0.0).astype(act_dt) for y in ys]


# ------------------------------- module wrapper -------------------------------- #

class ExponentialFunnelPallas:
    """Mirrors models/layer_blocks.py::ExponentialFunnel (activation='ReLU', eval mode)."""

    def __init__(self, input_dim: int, output_dim: int, key,
                 eps: float = 1e-5, param_dtype=jnp.bfloat16, block_m: int = 512):
        self.eps = eps
        self.input_dim = input_dim
        self.output_dim = output_dim
        self.block_m = block_m
        self.act_dtype = param_dtype              # activations travel in the weight dtype

        start_power = math.ceil(math.log2(input_dim))
        end_power = math.ceil(math.log2(output_dim)) + 1
        hidden_dims = [2 ** p for p in range(start_power, end_power - 1, -1)]
        hidden_dims[0] = input_dim
        self.hidden_dims = hidden_dims

        dims = hidden_dims + [output_dim]
        # Lane-dense padded feature sizes (multiples of 128).
        self.padded_dims = [max(LANE, _round_up(d, LANE)) for d in dims]

        self.raw_hidden = []      # (w, b, gamma, beta, rmean, rvar) for the unfolded reference
        self.raw_last = None
        self.weights = []         # padded, BN-folded, param_dtype
        self.shifts = []          # padded, f32 (epilogue stays f32)

        def append_padded(w, shift, din_pad, dout_pad):
            wp = jnp.zeros((din_pad, dout_pad), jnp.float32)
            wp = wp.at[: w.shape[0], : w.shape[1]].set(w)
            sp = jnp.zeros((1, dout_pad), jnp.float32)
            sp = sp.at[0, : shift.shape[0]].set(shift)
            self.weights.append(wp.astype(param_dtype))
            self.shifts.append(sp)

        # Hidden blocks: Linear -> BN(eval) -> ReLU -> Dropout(identity)
        for i in range(len(hidden_dims) - 1):
            din, dout = dims[i], dims[i + 1]
            key, k1, k2, k3, k4, k5, k6 = jax.random.split(key, 7)
            bound = 1.0 / math.sqrt(din)
            w = jax.random.uniform(k1, (din, dout), jnp.float32, -bound, bound)
            b = jax.random.uniform(k2, (dout,), jnp.float32, -bound, bound)
            gamma = jax.random.uniform(k3, (dout,), jnp.float32, 0.5, 1.5)
            beta = jax.random.uniform(k4, (dout,), jnp.float32, -0.1, 0.1)
            rmean = jax.random.uniform(k5, (dout,), jnp.float32, -0.1, 0.1)
            rvar = jax.random.uniform(k6, (dout,), jnp.float32, 0.5, 1.5)
            self.raw_hidden.append((w, b, gamma, beta, rmean, rvar))

            # Fold BN(eval) fully into the weights:  y = ReLU(x @ (W*scale) + (b-mean)*scale + beta)
            scale = gamma / jnp.sqrt(rvar + eps)
            w_fold = w * scale[None, :]
            shift_fold = (b - rmean) * scale + beta
            append_padded(w_fold, shift_fold, self.padded_dims[i], self.padded_dims[i + 1])

        # Final Linear (no BN / activation)
        din, dout = dims[-2], dims[-1]
        key, k1, k2 = jax.random.split(key, 3)
        bound = 1.0 / math.sqrt(din)
        w = jax.random.uniform(k1, (din, dout), jnp.float32, -bound, bound)
        b = jax.random.uniform(k2, (dout,), jnp.float32, -bound, bound)
        self.raw_last = (w, b)
        append_padded(w, b, self.padded_dims[-2], self.padded_dims[-1])

    # ---- fused forward -------------------------------------------------------- #
    def __call__(self, x):
        B = x.shape[0]
        in_pad = self.padded_dims[0]
        out_pad = self.padded_dims[-1]
        act_dt = self.act_dtype
        act_isz = jnp.dtype(act_dt).itemsize

        # Batch tile: prefer >=2 tiles (dual-TensorCore sharding on v7x via "parallel"),
        # 16-aligned when possible (enables the in-kernel dual-chain split), big tiles for
        # pipeline efficiency on v5e/v6e.
        rounded_B = _round_up(B, 8)
        if rounded_B <= self.block_m and B >= 16:
            tm = _round_up(-(-B // 2), 16)                   # ceil(B/2), 16-aligned
            if _round_up(B, tm) // tm < 2:
                tm = _round_up(-(-B // 2), 8)                # keep >= 2 tiles for dual-TC v7x
        else:
            tm = min(self.block_m, rounded_B)
        B_pad = _round_up(B, tm)

        # Pad/cast only when needed (avoid an extra HBM round-trip when already aligned).
        xb = x.astype(act_dt) if x.dtype != jnp.dtype(act_dt) else x
        if B_pad != B or x.shape[1] != in_pad:
            xb = jnp.pad(xb, ((0, B_pad - B), (0, in_pad - x.shape[1])))

        in_specs = [pl.BlockSpec((tm, in_pad), lambda i: (i, 0))]
        args = [xb]
        for w, s in zip(self.weights, self.shifts):
            # Constant index_map + single buffering: weights stay VMEM-resident across batch
            # grid steps without paying for a second (useless) pipeline buffer.
            in_specs.append(pl.BlockSpec(w.shape, lambda i: (0, 0),
                                         pipeline_mode=pl.Buffered(1)))
            in_specs.append(pl.BlockSpec(s.shape, lambda i: (0, 0),
                                         pipeline_mode=pl.Buffered(1)))
            args.append(w)
            args.append(s)

        # Explicit VMEM budget: resident weights (x1 thanks to Buffered(1)) + double-buffered
        # activation/output tiles + headroom for in-flight f32/bf16 intermediates.
        w_bytes = sum(int(a.size) * a.dtype.itemsize for a in self.weights)
        w_bytes += sum(int(a.size) * a.dtype.itemsize for a in self.shifts)
        max_pad = max(self.padded_dims)
        vmem_need = (w_bytes
                     + 2 * tm * in_pad * act_isz
                     + 2 * tm * out_pad * 4
                     + 4 * tm * max_pad * 4)
        vmem_limit = int(min(max(vmem_need + (4 << 20), 32 << 20), 100 << 20))
        # TODO(synk): for very large input_dim on v7x (resident weights > ~48 MiB of its 64 MiB
        # VMEM), stream the layer-0 weight from HBM (pltpu.emit_pipeline / K-tiling) instead of
        # keeping every layer resident.

        out = pl.pallas_call(
            _funnel_kernel,
            out_shape=jax.ShapeDtypeStruct((B_pad, out_pad), jnp.float32),
            grid=(B_pad // tm,),
            in_specs=in_specs,
            out_specs=pl.BlockSpec((tm, out_pad), lambda i: (i, 0)),
            compiler_params=pltpu.CompilerParams(
                dimension_semantics=("parallel",),
                vmem_limit_bytes=vmem_limit,
            ),
        )(*args)

        if B_pad == B and out_pad == self.output_dim:
            return out
        return out[:B, : self.output_dim]

    # ---- references ----------------------------------------------------------- #
    def reference(self, x):
        """Pure-jnp mirror of the kernel math (same folded/padded params, same casts)."""
        in_pad = self.padded_dims[0]
        h = x.astype(self.act_dtype)
        if x.shape[1] != in_pad:
            h = jnp.pad(h, ((0, 0), (0, in_pad - x.shape[1])))
        n = len(self.weights)
        for li, (w, s) in enumerate(zip(self.weights, self.shifts)):
            y = jnp.dot(h, w, preferred_element_type=jnp.float32) + s
            h = jnp.maximum(y, 0.0).astype(self.act_dtype) if li < n - 1 else y
        return h[:, : self.output_dim]

    def reference_pytorch(self, x):
        """Original (unfolded) eval-mode semantics: Linear -> BN(running stats) -> ReLU -> Dropout(id)."""
        h = x
        for (w, b, gamma, beta, rmean, rvar) in self.raw_hidden:
            y = h @ w + b
            y = (y - rmean) / jnp.sqrt(rvar + self.eps) * gamma + beta
            h = jnp.maximum(y, 0.0)
        w, b = self.raw_last
        return h @ w + b


if __name__ == "__main__":
    key = jax.random.PRNGKey(0)
    key, k_param, k_x = jax.random.split(key, 3)

    batch, input_dim, output_dim = 8, 32, 8          # hidden_dims -> [32, 16]
    x = jax.random.normal(k_x, (batch, input_dim), jnp.float32)

    # f32 model: strict check against the kernel-mirror reference, plus a consistency check
    # of the BN fold against the unfolded PyTorch-style eval math.
    model_f32 = ExponentialFunnelPallas(input_dim, output_dim, k_param, param_dtype=jnp.float32)
    out = jax.block_until_ready(model_f32(x))
    assert out.shape == (batch, output_dim), out.shape
    ref = model_f32.reference(x)
    assert jnp.allclose(out, ref, atol=1e-4, rtol=1e-4), "kernel mismatch vs folded reference"
    ref_pt = model_f32.reference_pytorch(x)
    assert jnp.allclose(ref, ref_pt, atol=2e-2, rtol=2e-2), "BN fold mismatch vs unfolded semantics"

    # Larger batch: exercises the multi-tile grid (v7x dual-TC path) and the in-kernel
    # dual-chain split (tm % 16 == 0).
    x_big = jax.random.normal(k_x, (32, input_dim), jnp.float32)
    out_big = jax.block_until_ready(model_f32(x_big))
    assert out_big.shape == (32, output_dim), out_big.shape
    ref_big = model_f32.reference(x_big)
    assert jnp.allclose(out_big, ref_big, atol=1e-4, rtol=1e-4), "multi-tile kernel mismatch"

    # Default bf16 model (recommended on v6e/v7x): bf16 weights + activations, f32 accumulation.
    # NOTE: activations are re-cast to bf16 per layer, so error vs. pure-f32 math grows with
    # funnel depth; the folded-reference check below uses matching bf16 casts.
    model_bf16 = ExponentialFunnelPallas(input_dim, output_dim, k_param)
    out_bf16 = jax.block_until_ready(model_bf16(x))
    ref_bf16 = model_bf16.reference(x)
    assert jnp.allclose(out_bf16, ref_bf16, atol=1e-2, rtol=1e-2), "bf16 kernel mismatch"

    print("KERNEL_OK")
</pallas_src>

<mosaic_0001>
module attributes {stable_mosaic.version = 11 : i64} {
  func.func @_funnel_kernel(%arg0: i32, %arg1: memref<8x128xf32, #tpu.memory_space<vmem>>, %arg2: memref<128x128xf32, #tpu.memory_space<vmem>>, %arg3: memref<1x128xf32, #tpu.memory_space<vmem>>, %arg4: memref<128x128xf32, #tpu.memory_space<vmem>>, %arg5: memref<1x128xf32, #tpu.memory_space<vmem>>, %arg6: memref<8x128xf32, #tpu.memory_space<vmem>>) attributes {dimension_semantics = [#tpu.dimension_semantics<parallel>], iteration_bounds = array<i64: 1>, scalar_prefetch = 0 : i64, scratch_operands = 0 : i64, tpu.core_type = #tpu.core_type<tc>, window_params = [{transform_indices = @transform_0, window_bounds = array<i64: 8, 128>}, {pipeline_mode = #tpu.pipeline_mode<synchronous>, transform_indices = @transform_1, window_bounds = array<i64: 128, 128>}, {pipeline_mode = #tpu.pipeline_mode<synchronous>, transform_indices = @transform_2, window_bounds = array<i64: 1, 128>}, {pipeline_mode = #tpu.pipeline_mode<synchronous>, transform_indices = @transform_3, window_bounds = array<i64: 128, 128>}, {pipeline_mode = #tpu.pipeline_mode<synchronous>, transform_indices = @transform_4, window_bounds = array<i64: 1, 128>}, {transform_indices = @transform_5, window_bounds = array<i64: 8, 128>}]} {
    %c0 = arith.constant 0 : index
    %c0_0 = arith.constant 0 : index
    %0 = vector.load %arg1[%c0, %c0_0] : memref<8x128xf32, #tpu.memory_space<vmem>>, vector<8x128xf32>
    %c0_1 = arith.constant 0 : index
    %c0_2 = arith.constant 0 : index
    %1 = vector.load %arg2[%c0_1, %c0_2] : memref<128x128xf32, #tpu.memory_space<vmem>>, vector<128x128xf32>
    %c0_3 = arith.constant 0 : index
    %c0_4 = arith.constant 0 : index
    %2 = vector.load %arg3[%c0_3, %c0_4] : memref<1x128xf32, #tpu.memory_space<vmem>>, vector<1x128xf32>
    %cst = arith.constant dense<0.000000e+00> : vector<8x128xf32>
    %3 = tpu.matmul %0, %1, %cst {dimension_numbers = #tpu.dot_dimension_numbers<[1], [0], [0], [1], [0, 0, 1, 1], [], []>} : vector<8x128xf32>, vector<128x128xf32>, vector<8x128xf32> -> vector<8x128xf32>
    %4 = vector.broadcast %2 : vector<1x128xf32> to vector<8x128xf32>
    %5 = arith.addf %3, %4 : vector<8x128xf32>
    %cst_5 = arith.constant 0.000000e+00 : f32
    %6 = vector.broadcast %cst_5 : f32 to vector<8x128xf32>
    %7 = arith.maximumf %5, %6 : vector<8x128xf32>
    %c0_6 = arith.constant 0 : index
    %c0_7 = arith.constant 0 : index
    %8 = vector.load %arg4[%c0_6, %c0_7] : memref<128x128xf32, #tpu.memory_space<vmem>>, vector<128x128xf32>
    %c0_8 = arith.constant 0 : index
    %c0_9 = arith.constant 0 : index
    %9 = vector.load %arg5[%c0_8, %c0_9] : memref<1x128xf32, #tpu.memory_space<vmem>>, vector<1x128xf32>
    %cst_10 = arith.constant dense<0.000000e+00> : vector<8x128xf32>
    %10 = tpu.matmul %7, %8, %cst_10 {dimension_numbers = #tpu.dot_dimension_numbers<[1], [0], [0], [1], [0, 0, 1, 1], [], []>} : vector<8x128xf32>, vector<128x128xf32>, vector<8x128xf32> -> vector<8x128xf32>
    %11 = vector.broadcast %9 : vector<1x128xf32> to vector<8x128xf32>
    %12 = arith.addf %10, %11 : vector<8x128xf32>
    %c0_11 = arith.constant 0 : index
    %c0_12 = arith.constant 0 : index
    %13 = vector.load %arg6[%c0_11, %c0_12] : memref<8x128xf32, #tpu.memory_space<vmem>>, vector<8x128xf32>
    tpu.vector_store %arg6[%c0_11, %c0_12], %12 {strides = array<i32>} : memref<8x128xf32, #tpu.memory_space<vmem>>, vector<8x128xf32>,
    return
  }
  func.func @transform_0(%arg0: i32) -> (i32, i32) {
    %c0_i32 = arith.constant 0 : i32
    %c0_i32_0 = arith.constant 0 : i32
    return %arg0, %c0_i32 : i32, i32
  }
  func.func @transform_1(%arg0: i32) -> (i32, i32) {
    %c0_i32 = arith.constant 0 : i32
    %c0_i32_0 = arith.constant 0 : i32
    %c0_i32_1 = arith.constant 0 : i32
    return %c0_i32, %c0_i32_0 : i32, i32
  }
  func.func @transform_2(%arg0: i32) -> (i32, i32) {
    %c0_i32 = arith.constant 0 : i32
    %c0_i32_0 = arith.constant 0 : i32
    %c0_i32_1 = arith.constant 0 : i32
    return %c0_i32, %c0_i32_0 : i32, i32
  }
  func.func @transform_3(%arg0: i32) -> (i32, i32) {
    %c0_i32 = arith.constant 0 : i32
    %c0_i32_0 = arith.constant 0 : i32
    %c0_i32_1 = arith.constant 0 : i32
    return %c0_i32, %c0_i32_0 : i32, i32
  }
  func.func @transform_4(%arg0: i32) -> (i32, i32) {
    %c0_i32 = arith.constant 0 : i32
    %c0_i32_0 = arith.constant 0 : i32
    %c0_i32_1 = arith.constant 0 : i32
    return %c0_i32, %c0_i32_0 : i32, i32
  }
  func.func @transform_5(%arg0: i32) -> (i32, i32) {
    %c0_i32 = arith.constant 0 : i32
    %c0_i32_0 = arith.constant 0 : i32
    return %arg0, %c0_i32 : i32, i32
  }
}

</mosaic_0001>

<llo_original>
// kernel: tpu_custom_call.1
$region0: #{tpu_custom_call.1}
  #allocation0 [shape = 'u32[]', space=smem, size = 0x4, offset = 0x4, fixed_abs, tag = 'smem constant byte address 0x4 - core index']
  #allocation1 [shape = 'u32[144,128]{1,0:T(1,128)}', space=vmem, size = 0x12000, scoped, tag = 'internal scratch']
  %s0 = inlined_call_operand.hbm [shape: f32[8,128], index: 0, kind: input, shape index: {}]
  %s1 = inlined_call_operand.hbm [shape: f32[128,128], index: 1, kind: input, shape index: {}]
  %s2 = inlined_call_operand.vmem [shape: f32[1,128], index: 2, kind: input, shape index: {}]
  %s3 = inlined_call_operand.hbm [shape: f32[128,128], index: 3, kind: input, shape index: {}]
  %s4 = inlined_call_operand.vmem [shape: f32[1,128], index: 4, kind: input, shape index: {}]
  %s5 = inlined_call_operand.hbm [shape: f32[8,128], index: 5, kind: output, shape index: {}]
  %s6 = sld [smem:[#allocation0]]
  $region42: #{tpu_custom_call.1} parent=0
    _
  %s8 = ssub.s32 1, %s6
  %s9 = scalar_select 0, %s8, %s6
  $region1: #{tpu_custom_call.1} parent=0
    #allocation2 [shape = 'u8[4096]{0}', space=vmem, size = 0x1000, scoped, tag = 'input window, operand 0, single buffered']
    #allocation3 [shape = 's32[1]{0}', space=sflag, size = 0x4, scoped, tag = 'scoped memory for tpu_custom_call.1']
    #allocation4 [shape = 's32[1]{0}', space=sflag, size = 0x4, scoped, tag = 'scoped memory for tpu_custom_call.1']
    #allocation5 [shape = 'u8[65536]{0}', space=vmem, size = 0x10000, scoped, tag = 'input window, operand 1, single buffered']
    #allocation6 [shape = 's32[1]{0}', space=sflag, size = 0x4, scoped, tag = 'scoped memory for tpu_custom_call.1']
    #allocation7 [shape = 'u8[65536]{0}', space=vmem, size = 0x10000, scoped, tag = 'input window, operand 3, single buffered']
    #allocation8 [shape = 'u8[4096]{0}', space=vmem, size = 0x1000, scoped, tag = 'output window, operand 0, single buffered']
    %10 = vsyncpa [#allocation3], 0
    %11 = vsyncpa [#allocation6], 0
    %12 = vsyncpa [#allocation4], 0
    // Predicated region
    $region2: #{tpu_custom_call.1} parent=1 // pred_check
      _
    $region3: #{tpu_custom_call.1} parent=1 // pred_check_branch
      %14 = sbr.rel (0) target = $region5
    $region4: #{tpu_custom_call.1} parent=1 // pred_region
      %s16 = ssub.s32 128, 128
      %17 = vsyncadd [#allocation3], %s16
      %s19 = sshll.u32 [#allocation2], 4
      %s20 = int_to_ptr.vmem [resolvable:$true] %s19
      %22 = dma.hbm_to_vmem [thread:$0]  %s0, 128, %s20, [#allocation3]
    $region5: #{tpu_custom_call.1} parent=1 // pred_fallthru
      _
    // Predicated region
    $region6: #{tpu_custom_call.1} parent=1 // pred_check
      _
    $region7: #{tpu_custom_call.1} parent=1 // pred_check_branch
      %24 = sbr.rel (0) target = $region9
    $region8: #{tpu_custom_call.1} parent=1 // pred_region
      %s26 = ssub.s32 2048, 2048
      %27 = vsyncadd [#allocation6], %s26
      %s28 = sshll.u32 [#allocation5], 4
      %s29 = int_to_ptr.vmem [resolvable:$true] %s28
      %34 = dma.hbm_to_vmem [thread:$0]  %s1, 2048, %s29, [#allocation6], 128, 128, 8
    $region9: #{tpu_custom_call.1} parent=1 // pred_fallthru
      _
    // Predicated region
    $region10: #{tpu_custom_call.1} parent=1 // pred_check
      _
    $region11: #{tpu_custom_call.1} parent=1 // pred_check_branch
      %36 = sbr.rel (0) target = $region13
    $region12: #{tpu_custom_call.1} parent=1 // pred_region
      _
    $region13: #{tpu_custom_call.1} parent=1 // pred_fallthru
      _
    // Predicated region
    $region14: #{tpu_custom_call.1} parent=1 // pred_check
      _
    $region15: #{tpu_custom_call.1} parent=1 // pred_check_branch
      %38 = sbr.rel (0) target = $region17
    $region16: #{tpu_custom_call.1} parent=1 // pred_region
      %s40 = ssub.s32 2048, 2048
      %41 = vsyncadd [#allocation6], %s40
      %s42 = sshll.u32 [#allocation7], 4
      %s43 = int_to_ptr.vmem [resolvable:$true] %s42
      %48 = dma.hbm_to_vmem [thread:$0]  %s3, 2048, %s43, [#allocation6], 128, 128, 8
    $region17: #{tpu_custom_call.1} parent=1 // pred_fallthru
      _
    // Predicated region
    $region18: #{tpu_custom_call.1} parent=1 // pred_check
      _
    $region19: #{tpu_custom_call.1} parent=1 // pred_check_branch
      %50 = sbr.rel (0) target = $region21
    $region20: #{tpu_custom_call.1} parent=1 // pred_region
      _
    $region21: #{tpu_custom_call.1} parent=1 // pred_fallthru
      _
    // Predicated region
    $region22: #{tpu_custom_call.1} parent=1 // pred_check
      _
    $region23: #{tpu_custom_call.1} parent=1 // pred_check_branch
      %52 = sbr.rel (0) target = $region25
    $region24: #{tpu_custom_call.1} parent=1 // pred_region
      %53 = dma.done [#allocation3], 128
    $region25: #{tpu_custom_call.1} parent=1 // pred_fallthru
      _
    // Predicated region
    $region26: #{tpu_custom_call.1} parent=1 // pred_check
      _
    $region27: #{tpu_custom_call.1} parent=1 // pred_check_branch
      %55 = sbr.rel (0) target = $region29
    $region28: #{tpu_custom_call.1} parent=1 // pred_region
      %56 = dma.done [#allocation6], 2048
    $region29: #{tpu_custom_call.1} parent=1 // pred_fallthru
      _
    // Predicated region
    $region30: #{tpu_custom_call.1} parent=1 // pred_check
      _
    $region31: #{tpu_custom_call.1} parent=1 // pred_check_branch
      %58 = sbr.rel (0) target = $region33
    $region32: #{tpu_custom_call.1} parent=1 // pred_region
      %59 = dma.done [#allocation6], 2048
    $region33: #{tpu_custom_call.1} parent=1 // pred_fallthru
      _
    %v60 = vld [vmem:[#allocation2] sm:$0xff]
    %v61 = vld [vmem:[#allocation5] sm:$0xff]
    %v62 = vld [vmem:[#allocation5 + $0x8] sm:$0xff]
    %v63 = vld [vmem:[#allocation5 + $0x10] sm:$0xff]
    %v64 = vld [vmem:[#allocation5 + $0x18] sm:$0xff]
    %v65 = vld [vmem:[#allocation5 + $0x20] sm:$0xff]
    %v66 = vld [vmem:[#allocation5 + $0x28] sm:$0xff]
    %v67 = vld [vmem:[#allocation5 + $0x30] sm:$0xff]
    %v68 = vld [vmem:[#allocation5 + $0x38] sm:$0xff]
    %v69 = vld [vmem:[#allocation5 + $0x40] sm:$0xff]
    %v70 = vld [vmem:[#allocation5 + $0x48] sm:$0xff]
    %v71 = vld [vmem:[#allocation5 + $0x50] sm:$0xff]
    %v72 = vld [vmem:[#allocation5 + $0x58] sm:$0xff]
    %v73 = vld [vmem:[#allocation5 + $0x60] sm:$0xff]
    %v74 = vld [vmem:[#allocation5 + $0x68] sm:$0xff]
    %v75 = vld [vmem:[#allocation5 + $0x70] sm:$0xff]
    %v76 = vld [vmem:[#allocation5 + $0x78] sm:$0xff]
    %v77 = vld [vmem:[%s2] sm:$0x1]
    %v79 = vlaneseq
    %v80 = vshrl.u32 %v79, 7
    %v81 = vsub.s32 0, %v80
    %v82 = vrot.slane %v77, %v81
    %84 = vmatprep.subr.mxu0 0.0
    %85 = vmatpush1.msra.mxu0 %v61
    %86 = vmatprep.subr.mxu0 0.0
    %87 = vmatpush1.msra.mxu0 %v62
    %88 = vmatprep.subr.mxu0 0.0
    %89 = vmatpush1.msra.mxu0 %v63
    %90 = vmatprep.subr.mxu0 0.0
    %91 = vmatpush1.msra.mxu0 %v64
    %92 = vmatprep.subr.mxu0 0.0
    %93 = vmatpush1.msra.mxu0 %v65
    %94 = vmatprep.subr.mxu0 0.0
    %95 = vmatpush1.msra.mxu0 %v66
    %96 = vmatprep.subr.mxu0 0.0
    %97 = vmatpush1.msra.mxu0 %v67
    %98 = vmatprep.subr.mxu0 0.0
    %99 = vmatpush1.msra.mxu0 %v68
    %100 = vmatprep.subr.mxu0 0.0
    %101 = vmatpush1.msra.mxu0 %v69
    %102 = vmatprep.subr.mxu0 0.0
    %103 = vmatpush1.msra.mxu0 %v70
    %104 = vmatprep.subr.mxu0 0.0
    %105 = vmatpush1.msra.mxu0 %v71
    %106 = vmatprep.subr.mxu0 0.0
    %107 = vmatpush1.msra.mxu0 %v72
    %108 = vmatprep.subr.mxu0 0.0
    %109 = vmatpush1.msra.mxu0 %v73
    %110 = vmatprep.subr.mxu0 0.0
    %111 = vmatpush1.msra.mxu0 %v74
    %112 = vmatprep.subr.mxu0 0.0
    %113 = vmatpush1.msra.mxu0 %v75
    %114 = vmatprep.subr.mxu0 0.0
    %115 = vmatpush1.msra.mxu0 %v76
    %116 = vmatprep.subr.mxu0 0.0
    %117 = vmatpush1.msra.mxu0 0.0
    %118 = vmatprep.subr.mxu0 0.0
    %119 = vmatpush1.msra.mxu0 0.0
    %120 = vmatprep.subr.mxu0 0.0
    %121 = vmatpush1.msra.mxu0 0.0
    %122 = vmatprep.subr.mxu0 0.0
    %123 = vmatpush1.msra.mxu0 0.0
    %124 = vmatprep.subr.mxu0 0.0
    %125 = vmatpush1.msra.mxu0 0.0
    %126 = vmatprep.subr.mxu0 0.0
    %127 = vmatpush1.msra.mxu0 0.0
    %128 = vmatprep.subr.mxu0 0.0
    %129 = vmatpush1.msra.mxu0 0.0
    %130 = vmatprep.subr.mxu0 0.0
    %131 = vmatpush1.msra.mxu0 0.0
    %132 = vmatprep.subr.mxu0 0.0
    %133 = vmatpush1.msra.mxu0 0.0
    %134 = vmatprep.subr.mxu0 0.0
    %135 = vmatpush1.msra.mxu0 0.0
    %136 = vmatprep.subr.mxu0 0.0
    %137 = vmatpush1.msra.mxu0 0.0
    %138 = vmatprep.subr.mxu0 0.0
    %139 = vmatpush1.msra.mxu0 0.0
    %140 = vmatprep.subr.mxu0 0.0
    %141 = vmatpush1.msra.mxu0 0.0
    %142 = vmatprep.subr.mxu0 0.0
    %143 = vmatpush1.msra.mxu0 0.0
    %144 = vmatprep.subr.mxu0 0.0
    %145 = vmatpush1.msra.mxu0 0.0
    %146 = vmatprep.subr.mxu0 0.0
    %147 = vmatpush1.msra.mxu0 0.0
    %148 = vmatprep.mubr.f32.mxu0 0.0
    %149 = vmatmul.mubr.f32.gmra.mrb[0].mxu0 %v60
    %v150 = vpop.f32.mrb[0].mxu0
    %v151 = vadd.f32 %v82, %v150
    %v152 = vpop.f32.mrb[0].mxu0
    %153 = vdwg.mxu0
    %v154 = vmax.f32 %v151, 0.0
    %v155 = vld [vmem:[#allocation7] sm:$0xff]
    %v156 = vld [vmem:[#allocation7 + $0x8] sm:$0xff]
    %v157 = vld [vmem:[#allocation7 + $0x10] sm:$0xff]
    %v158 = vld [vmem:[#allocation7 + $0x18] sm:$0xff]
    %v159 = vld [vmem:[#allocation7 + $0x20] sm:$0xff]
    %v160 = vld [vmem:[#allocation7 + $0x28] sm:$0xff]
    %v161 = vld [vmem:[#allocation7 + $0x30] sm:$0xff]
    %v162 = vld [vmem:[#allocation7 + $0x38] sm:$0xff]
    %v163 = vld [vmem:[#allocation7 + $0x40] sm:$0xff]
    %v164 = vld [vmem:[#allocation7 + $0x48] sm:$0xff]
    %v165 = vld [vmem:[#allocation7 + $0x50] sm:$0xff]
    %v166 = vld [vmem:[#allocation7 + $0x58] sm:$0xff]
    %v167 = vld [vmem:[#allocation7 + $0x60] sm:$0xff]
    %v168 = vld [vmem:[#allocation7 + $0x68] sm:$0xff]
    %v169 = vld [vmem:[#allocation7 + $0x70] sm:$0xff]
    %v170 = vld [vmem:[#allocation7 + $0x78] sm:$0xff]
    %v171 = vld [vmem:[%s4] sm:$0x1]
    %v173 = vlaneseq
    %v174 = vshrl.u32 %v173, 7
    %v175 = vsub.s32 0, %v174
    %v176 = vrot.slane %v171, %v175
    %178 = vmatprep.subr.mxu0 0.0
    %179 = vmatpush1.msra.mxu0 %v155
    %180 = vmatprep.subr.mxu0 0.0
    %181 = vmatpush1.msra.mxu0 %v156
    %182 = vmatprep.subr.mxu0 0.0
    %183 = vmatpush1.msra.mxu0 %v157
    %184 = vmatprep.subr.mxu0 0.0
    %185 = vmatpush1.msra.mxu0 %v158
    %186 = vmatprep.subr.mxu0 0.0
    %187 = vmatpush1.msra.mxu0 %v159
    %188 = vmatprep.subr.mxu0 0.0
    %189 = vmatpush1.msra.mxu0 %v160
    %190 = vmatprep.subr.mxu0 0.0
    %191 = vmatpush1.msra.mxu0 %v161
    %192 = vmatprep.subr.mxu0 0.0
    %193 = vmatpush1.msra.mxu0 %v162
    %194 = vmatprep.subr.mxu0 0.0
    %195 = vmatpush1.msra.mxu0 %v163
    %196 = vmatprep.subr.mxu0 0.0
    %197 = vmatpush1.msra.mxu0 %v164
    %198 = vmatprep.subr.mxu0 0.0
    %199 = vmatpush1.msra.mxu0 %v165
    %200 = vmatprep.subr.mxu0 0.0
    %201 = vmatpush1.msra.mxu0 %v166
    %202 = vmatprep.subr.mxu0 0.0
    %203 = vmatpush1.msra.mxu0 %v167
    %204 = vmatprep.subr.mxu0 0.0
    %205 = vmatpush1.msra.mxu0 %v168
    %206 = vmatprep.subr.mxu0 0.0
    %207 = vmatpush1.msra.mxu0 %v169
    %208 = vmatprep.subr.mxu0 0.0
    %209 = vmatpush1.msra.mxu0 %v170
    %210 = vmatprep.subr.mxu0 0.0
    %211 = vmatpush1.msra.mxu0 0.0
    %212 = vmatprep.subr.mxu0 0.0
    %213 = vmatpush1.msra.mxu0 0.0
    %214 = vmatprep.subr.mxu0 0.0
    %215 = vmatpush1.msra.mxu0 0.0
    %216 = vmatprep.subr.mxu0 0.0
    %217 = vmatpush1.msra.mxu0 0.0
    %218 = vmatprep.subr.mxu0 0.0
    %219 = vmatpush1.msra.mxu0 0.0
    %220 = vmatprep.subr.mxu0 0.0
    %221 = vmatpush1.msra.mxu0 0.0
    %222 = vmatprep.subr.mxu0 0.0
    %223 = vmatpush1.msra.mxu0 0.0
    %224 = vmatprep.subr.mxu0 0.0
    %225 = vmatpush1.msra.mxu0 0.0
    %226 = vmatprep.subr.mxu0 0.0
    %227 = vmatpush1.msra.mxu0 0.0
    %228 = vmatprep.subr.mxu0 0.0
    %229 = vmatpush1.msra.mxu0 0.0
    %230 = vmatprep.subr.mxu0 0.0
    %231 = vmatpush1.msra.mxu0 0.0
    %232 = vmatprep.subr.mxu0 0.0
    %233 = vmatpush1.msra.mxu0 0.0
    %234 = vmatprep.subr.mxu0 0.0
    %235 = vmatpush1.msra.mxu0 0.0
    %236 = vmatprep.subr.mxu0 0.0
    %237 = vmatpush1.msra.mxu0 0.0
    %238 = vmatprep.subr.mxu0 0.0
    %239 = vmatpush1.msra.mxu0 0.0
    %240 = vmatprep.subr.mxu0 0.0
    %241 = vmatpush1.msra.mxu0 0.0
    %242 = vmatprep.mubr.f32.mxu0 0.0
    %243 = vmatmul.mubr.f32.gmra.mrb[0].mxu0 %v154
    %v244 = vpop.f32.mrb[0].mxu0
    %v245 = vadd.f32 %v176, %v244
    %v246 = vpop.f32.mrb[0].mxu0
    %247 = vdwg.mxu0
    %248 = vst [vmem:[#allocation8] sm:$0xff] %v245
    // Predicated region
    $region34: #{tpu_custom_call.1} parent=1 // pred_check
      _
    $region35: #{tpu_custom_call.1} parent=1 // pred_check_branch
      %250 = sbr.rel (0) target = $region37
    $region36: #{tpu_custom_call.1} parent=1 // pred_region
      %s252 = ssub.s32 128, 128
      %253 = vsyncadd [#allocation4], %s252
      %s255 = sshll.u32 [#allocation8], 4
      %s256 = int_to_ptr.vmem [resolvable:$true] %s255
      %258 = dma.vmem_to_hbm [thread:$0]  %s256, 128, %s5, [#allocation4]
    $region37: #{tpu_custom_call.1} parent=1 // pred_fallthru
      _
    // Predicated region
    $region38: #{tpu_custom_call.1} parent=1 // pred_check
      _
    $region39: #{tpu_custom_call.1} parent=1 // pred_check_branch
      %260 = sbr.rel (0) target = $region41
    $region40: #{tpu_custom_call.1} parent=1 // pred_region
      %261 = dma.done [#allocation4], 128
    $region41: #{tpu_custom_call.1} parent=1 // pred_fallthru
      _
    %262 = vsyncpa [#allocation3], 1
    %263 = vsyncpa [#allocation6], 1
    %264 = vsyncpa [#allocation4], 1

</llo_original>
